<compile_context>
chip_gen: v6e
topology: v6e:2x2x1
jax: 0.10.0
libtpu: 0.0.40
codegen_flags: <defaults>
</compile_context>

<pallas_src>
import jax
import jax.numpy as jnp
from jax import lax
from jax.experimental import pallas as pl
from jax.experimental.pallas import tpu as pltpu

_LANES = 128      # vreg lane width
_SUBLANES = 8     # vreg sublane height
_OUT_COLS = 10    # torch.rand(len(x), 10)


def _round_up(v: int, m: int) -> int:
    return ((v + m - 1) // m) * m


def _mix32(v):
    """Avalanche hash on int32 (wrap-around multiply is well defined in XLA).

    Constants chosen to fit in a positive int32; quality is plenty for
    emulating torch.rand on a dummy module.  Only xor / logical-shift /
    integer-mul are used -> lowers everywhere (Mosaic + interpret).
    """
    v = v ^ lax.shift_right_logical(v, 16)
    v = v * jnp.int32(0x7FEB352D)
    v = v ^ lax.shift_right_logical(v, 15)
    v = v * jnp.int32(0x2C1B3C6D)
    v = v ^ lax.shift_right_logical(v, 16)
    return v


def _rand_kernel(seed_ref, o_ref):
    """Fill o_ref (block_rows, 128) with uniform [0, 1) float32."""
    block_rows, lanes = o_ref.shape
    base_row = pl.program_id(0) * block_rows

    # Global element counter for every slot of this tile (2-D iota for TPU).
    row = lax.broadcasted_iota(jnp.int32, (block_rows, lanes), 0)
    lane = lax.broadcasted_iota(jnp.int32, (block_rows, lanes), 1)
    flat = (base_row + row) * lanes + lane

    # Mix the seed once, then hash the counter.  Per-element counter means
    # different grid steps / TensorCores never repeat a stream.
    s = _mix32(seed_ref[0] ^ jnp.int32(0x5BD1E995))
    bits = _mix32(flat ^ s)

    # 23 uniform mantissa-quality bits -> [0, 1).  int32->f32 convert is the
    # most portable path (the exponent bit-trick needs a bitcast primitive
    # that is not guaranteed in interpret mode).
    mant = lax.shift_right_logical(bits, 9)
    o_ref[...] = mant.astype(jnp.float32) * jnp.float32(1.0 / (1 << 23))


def cnn_forward(x: jax.Array, seed: int = 0) -> jax.Array:
    """Pallas equivalent of CNN.forward: uniform [0, 1) of shape (len(x), 10).

    Only the static batch dimension of x is used (same as the PyTorch module);
    x itself is never fed to the kernel.
    """
    n = int(x.shape[0])
    total = n * _OUT_COLS

    # Packed, lane-dense slab: total elements laid out as (rows, 128).
    rows_needed = max(pl.cdiv(total, _LANES), 1)
    block_rows = min(512, _round_up(rows_needed, _SUBLANES))
    grid = pl.cdiv(rows_needed, block_rows)
    rows_padded = grid * block_rows

    out_padded = pl.pallas_call(
        _rand_kernel,
        out_shape=jax.ShapeDtypeStruct((rows_padded, _LANES), jnp.float32),
        grid=(grid,),
        in_specs=[pl.BlockSpec(memory_space=pltpu.MemorySpace.SMEM)],
        out_specs=pl.BlockSpec((block_rows, _LANES), lambda i: (i, 0)),
        compiler_params=pltpu.CompilerParams(
            dimension_semantics=("parallel",),
        ),
    )(jnp.asarray([seed], dtype=jnp.int32))

    # Free layout plumbing in the wrapper: dense slab -> (n, 10).
    return out_padded.reshape(-1)[:total].reshape(n, _OUT_COLS)


if __name__ == "__main__":
    key = jax.random.PRNGKey(0)
    # Small NCHW input consistent with the module (1 channel, 28x28), batch 2.
    x = jax.random.uniform(key, (2, 1, 28, 28), dtype=jnp.float32)

    out = cnn_forward(x, seed=0)
    out = jax.block_until_ready(out)

    assert out.shape == (x.shape[0], 10), out.shape
    assert out.dtype == jnp.float32, out.dtype
    assert bool(jnp.all(out >= 0.0)) and bool(jnp.all(out < 1.0))
    assert float(jnp.std(out)) > 0.0  # values actually vary

    print("KERNEL_OK")
</pallas_src>

<mosaic_0001>
module attributes {stable_mosaic.version = 11 : i64} {
  func.func @_rand_kernel(%arg0: i32, %arg1: memref<1xi32, #tpu.memory_space<smem>>, %arg2: memref<8x128xf32, #tpu.memory_space<vmem>>) attributes {dimension_semantics = [#tpu.dimension_semantics<parallel>], iteration_bounds = array<i64: 1>, scalar_prefetch = 0 : i64, scratch_operands = 0 : i64, tpu.core_type = #tpu.core_type<tc>, window_params = [{transform_indices = @transform_0, window_bounds = array<i64: 1>}, {transform_indices = @transform_1, window_bounds = array<i64: 8, 128>}]} {
    %c8_i32 = arith.constant 8 : i32
    %0 = arith.muli %arg0, %c8_i32 : i32
    %1 = tpu.iota {dimensions = array<i32: 0>} : vector<8x128xi32>
    %2 = tpu.iota {dimensions = array<i32: 1>} : vector<8x128xi32>
    %3 = vector.broadcast %0 : i32 to vector<8x128xi32>
    %4 = arith.addi %3, %1 : vector<8x128xi32>
    %c128_i32 = arith.constant 128 : i32
    %5 = vector.broadcast %c128_i32 : i32 to vector<8x128xi32>
    %6 = arith.muli %4, %5 : vector<8x128xi32>
    %7 = arith.addi %6, %2 : vector<8x128xi32>
    %c0 = arith.constant 0 : index
    %8 = memref.load %arg1[%c0] : memref<1xi32, #tpu.memory_space<smem>>
    %c1540483477_i32 = arith.constant 1540483477 : i32
    %9 = arith.xori %8, %c1540483477_i32 : i32
    %c16_i32 = arith.constant 16 : i32
    %10 = arith.shrui %9, %c16_i32 : i32
    %11 = arith.xori %9, %10 : i32
    %c2146121005_i32 = arith.constant 2146121005 : i32
    %12 = arith.muli %11, %c2146121005_i32 : i32
    %c15_i32 = arith.constant 15 : i32
    %13 = arith.shrui %12, %c15_i32 : i32
    %14 = arith.xori %12, %13 : i32
    %c739982445_i32 = arith.constant 739982445 : i32
    %15 = arith.muli %14, %c739982445_i32 : i32
    %c16_i32_0 = arith.constant 16 : i32
    %16 = arith.shrui %15, %c16_i32_0 : i32
    %17 = arith.xori %15, %16 : i32
    %18 = vector.broadcast %17 : i32 to vector<8x128xi32>
    %19 = arith.xori %7, %18 : vector<8x128xi32>
    %c16_i32_1 = arith.constant 16 : i32
    %20 = vector.broadcast %c16_i32_1 : i32 to vector<8x128xi32>
    %21 = arith.shrui %19, %20 : vector<8x128xi32>
    %22 = arith.xori %19, %21 : vector<8x128xi32>
    %c2146121005_i32_2 = arith.constant 2146121005 : i32
    %23 = vector.broadcast %c2146121005_i32_2 : i32 to vector<8x128xi32>
    %24 = arith.muli %22, %23 : vector<8x128xi32>
    %c15_i32_3 = arith.constant 15 : i32
    %25 = vector.broadcast %c15_i32_3 : i32 to vector<8x128xi32>
    %26 = arith.shrui %24, %25 : vector<8x128xi32>
    %27 = arith.xori %24, %26 : vector<8x128xi32>
    %c739982445_i32_4 = arith.constant 739982445 : i32
    %28 = vector.broadcast %c739982445_i32_4 : i32 to vector<8x128xi32>
    %29 = arith.muli %27, %28 : vector<8x128xi32>
    %c16_i32_5 = arith.constant 16 : i32
    %30 = vector.broadcast %c16_i32_5 : i32 to vector<8x128xi32>
    %31 = arith.shrui %29, %30 : vector<8x128xi32>
    %32 = arith.xori %29, %31 : vector<8x128xi32>
    %c9_i32 = arith.constant 9 : i32
    %33 = vector.broadcast %c9_i32 : i32 to vector<8x128xi32>
    %34 = arith.shrui %32, %33 : vector<8x128xi32>
    %35 = arith.sitofp %34 : vector<8x128xi32> to vector<8x128xf32>
    %cst = arith.constant 1.1920929E-7 : f32
    %36 = vector.broadcast %cst : f32 to vector<8x128xf32>
    %37 = arith.mulf %35, %36 : vector<8x128xf32>
    %c0_6 = arith.constant 0 : index
    %c0_7 = arith.constant 0 : index
    %38 = vector.load %arg2[%c0_6, %c0_7] : memref<8x128xf32, #tpu.memory_space<vmem>>, vector<8x128xf32>
    tpu.vector_store %arg2[%c0_6, %c0_7], %37 {strides = array<i32>} : memref<8x128xf32, #tpu.memory_space<vmem>>, vector<8x128xf32>,
    return
  }
  func.func @transform_0(%arg0: i32) -> i32 {
    %c0_i32 = arith.constant 0 : i32
    %c0_i32_0 = arith.constant 0 : i32
    return %c0_i32 : i32
  }
  func.func @transform_1(%arg0: i32) -> (i32, i32) {
    %c0_i32 = arith.constant 0 : i32
    %c0_i32_0 = arith.constant 0 : i32
    return %arg0, %c0_i32 : i32, i32
  }
}

</mosaic_0001>

<llo_original>
// kernel: tpu_custom_call.1
$region0: #{tpu_custom_call.1}
  #allocation0 [shape = 'u32[]', space=smem, size = 0x4, offset = 0x4, fixed_abs, tag = 'smem constant byte address 0x4 - core index']
  #allocation1 [shape = 'u32[144,128]{1,0:T(1,128)}', space=vmem, size = 0x12000, scoped, tag = 'internal scratch']
  #allocation2 [shape = 's32[1]{0:T(128)S(6)}', space=smem, size = 0x200, scoped, tag = 'scoped memory for tpu_custom_call.1']
  %s0 = inlined_call_operand.<no memory space> [shape: s32[1], index: 0, kind: input, shape index: {}]
  %s1 = inlined_call_operand.hbm [shape: f32[8,128], index: 1, kind: output, shape index: {}]
  %s2 = sld [smem:[#allocation0]]
  $region14: #{tpu_custom_call.1} parent=0
    _
  %s4 = ssub.s32 1, %s2
  %s5 = scalar_select 0, %s4, %s2
  %6 = sst [smem:[#allocation2]] %s0
  $region1: #{tpu_custom_call.1} parent=0
    #allocation3 [shape = 'u8[4096]{0}', space=vmem, size = 0x1000, scoped, tag = 'output window, operand 0, single buffered']
    #allocation4 [shape = 's32[1]{0}', space=sflag, size = 0x4, scoped, tag = 'scoped memory for tpu_custom_call.1']
    %7 = vsyncpa [#allocation4], 0
    // Predicated region
    $region2: #{tpu_custom_call.1} parent=1 // pred_check
      _
    $region3: #{tpu_custom_call.1} parent=1 // pred_check_branch
      %9 = sbr.rel (0) target = $region5
    $region4: #{tpu_custom_call.1} parent=1 // pred_region
      _
    $region5: #{tpu_custom_call.1} parent=1 // pred_fallthru
      _
    %s10 = smul.u32 0, 8
    %v11 = vlaneseq
    %v12 = vshrl.u32 %v11, 7
    %v13 = vlaneseq
    %v14 = vand.u32 %v13, 127
    %v15 = vstv %s10
    %v16 = vadd.s32 %v15, %v12
    %v17 = vmul.u32 %v16, 128
    %v18 = vadd.s32 %v17, %v14
    %s19 = sld [smem:[#allocation2]]
    %s20 = sxor.u32 %s19, 1540483477
    %s21 = sshrl.u32 %s20, 16
    %s22 = sxor.u32 %s20, %s21
    %s23 = smul.u32 %s22, 2146121005
    %s24 = sshrl.u32 %s23, 15
    %s25 = sxor.u32 %s23, %s24
    %s26 = smul.u32 %s25, 739982445
    %s27 = sshrl.u32 %s26, 16
    %s28 = sxor.u32 %s26, %s27
    %v29 = vstv %s28
    %v30 = vxor.u32 %v18, %v29
    %v31 = vshrl.u32 %v30, 16
    %v32 = vxor.u32 %v30, %v31
    %v33 = vmul.u32 %v32, 2146121005
    %v34 = vshrl.u32 %v33, 15
    %v35 = vxor.u32 %v33, %v34
    %v36 = vmul.u32 %v35, 739982445
    %v37 = vshrl.u32 %v36, 16
    %v38 = vxor.u32 %v36, %v37
    %v39 = vshrl.u32 %v38, 9
    %v40 = vcvt.s32.f32 %v39
    %v41 = vmul.f32 %v40, 1.1920929e-07
    %42 = vst [vmem:[#allocation3] sm:$0xff] %v41
    // Predicated region
    $region6: #{tpu_custom_call.1} parent=1 // pred_check
      _
    $region7: #{tpu_custom_call.1} parent=1 // pred_check_branch
      %44 = sbr.rel (0) target = $region9
    $region8: #{tpu_custom_call.1} parent=1 // pred_region
      %s46 = ssub.s32 128, 128
      %47 = vsyncadd [#allocation4], %s46
      %s49 = sshll.u32 [#allocation3], 4
      %s50 = int_to_ptr.vmem [resolvable:$true] %s49
      %52 = dma.vmem_to_hbm [thread:$0]  %s50, 128, %s1, [#allocation4]
    $region9: #{tpu_custom_call.1} parent=1 // pred_fallthru
      _
    // Predicated region
    $region10: #{tpu_custom_call.1} parent=1 // pred_check
      _
    $region11: #{tpu_custom_call.1} parent=1 // pred_check_branch
      %54 = sbr.rel (0) target = $region13
    $region12: #{tpu_custom_call.1} parent=1 // pred_region
      %55 = dma.done [#allocation4], 128
    $region13: #{tpu_custom_call.1} parent=1 // pred_fallthru
      _
    %56 = vsyncpa [#allocation4], 1

</llo_original>
